<compile_context>
chip_gen: v7x
topology: tpu7x:2x2x1
jax: 0.10.0
libtpu: 0.0.40
codegen_flags: <defaults>
</compile_context>

<pallas_src>
import functools

import jax
import jax.numpy as jnp
from jax.experimental import pallas as pl
from jax.experimental.pallas import tpu as pltpu

LANES = 128
SUBLANES = 8                          # f32 sublanes per vreg
TILE_BYTES_PER_INPUT = 2 << 20        # ~2 MiB of each input per grid step
VMEM_LIMIT_BYTES = 32 * 1024 * 1024   # explicit: covers buffers + temps on all gens
MIN_PALLAS_ELEMS = 1 << 20            # below this, plain JAX is strictly cheaper


def _charbonnier_kernel(x_ref, y_ref, o_ref, *, eps, n_valid, block_rows,
                        tiles_per_shard, num_tiles, fold_ways, needs_mask,
                        has_dummy):
    s = pl.program_id(0)            # shard axis  ("parallel", megacore)
    t = pl.program_id(1)            # tile axis   ("arbitrary", reduction)
    g = s * tiles_per_shard + t     # global tile index

    @pl.when(t == 0)
    def _init():
        o_ref[...] = jnp.zeros_like(o_ref)

    diff = x_ref[...].astype(jnp.float32) - y_ref[...].astype(jnp.float32)
    val = jnp.sqrt(diff * diff + jnp.float32(eps * eps))

    def _fold(v):
        # (block_rows, 128) -> (1, 8, 128) using `fold_ways` independent vreg
        # add chains (pure VPU adds, no cross-lane XLU work).
        r = block_rows // SUBLANES
        v4 = v.reshape(fold_ways, r // fold_ways, SUBLANES, LANES)
        return v4.sum(axis=1).sum(axis=0, keepdims=True)

    if needs_mask:
        # All padded + out-of-bounds elements live in the last global tile, so
        # only that tile pays for the iota/where mask.
        @pl.when(g < num_tiles - 1)
        def _acc():
            o_ref[...] += _fold(val)

        @pl.when(g == num_tiles - 1)
        def _acc_tail():
            row0 = (num_tiles - 1) * block_rows
            row = jax.lax.broadcasted_iota(jnp.int32, val.shape, 0) + row0
            col = jax.lax.broadcasted_iota(jnp.int32, val.shape, 1)
            full_rows = n_valid // LANES
            rem = n_valid % LANES
            valid = (row < full_rows) | ((row == full_rows) & (col < rem))
            o_ref[...] += _fold(jnp.where(valid, val, 0.0))
        # g >= num_tiles (dummy megacore tile) falls through both whens.
    elif has_dummy:
        @pl.when(g < num_tiles)
        def _acc():
            o_ref[...] += _fold(val)
    else:
        o_ref[...] += _fold(val)


def _charbonnier_pallas(output, gt, eps, max_tile_bytes=TILE_BYTES_PER_INPUT):
    n = output.size
    itemsize = jnp.dtype(output.dtype).itemsize
    packing = max(1, 4 // itemsize)
    sub_pack = SUBLANES * packing          # dtype-native sublane packing
    min_tile = sub_pack * LANES

    # Row-major flatten (no HBM copy); pad at most one minimal dtype-native
    # tile (a no-op for typical NCHW shapes).
    x = jnp.ravel(output)
    y = jnp.ravel(gt)
    pad = (-n) % min_tile
    if pad:
        x = jnp.pad(x, (0, pad))
        y = jnp.pad(y, (0, pad))
    rows = (n + pad) // LANES

    x2 = x.reshape(rows, LANES)
    y2 = y.reshape(rows, LANES)

    # Tile: ~max_tile_bytes of each input per grid step, rounded to the
    # dtype-native sublane packing (constant bytes/step across dtypes).
    max_block_rows = max(
        sub_pack, (max_tile_bytes // (LANES * itemsize)) // sub_pack * sub_pack)
    block_rows = min(max_block_rows, rows)
    num_tiles = -(-rows // block_rows)

    # Unconditional 2-way split whenever there is more than one tile so the
    # reduction uses both v7x TensorCores; a single dummy tile (odd tile
    # count) is skipped in-kernel and its DMA is clamped to a valid block.
    num_shards = 2 if num_tiles >= 2 else 1
    tiles_per_shard = -(-num_tiles // num_shards)
    has_dummy = num_shards * tiles_per_shard > num_tiles
    needs_mask = (pad > 0) or (rows % block_rows != 0)

    # Largest of 8/4/2/1 that divides the per-tile vreg count -> independent
    # add chains in the fold.
    r = block_rows // SUBLANES
    fold_ways = next(k for k in (8, 4, 2, 1) if r % k == 0)

    kernel = functools.partial(
        _charbonnier_kernel,
        eps=float(eps),
        n_valid=int(n),
        block_rows=int(block_rows),
        tiles_per_shard=int(tiles_per_shard),
        num_tiles=int(num_tiles),
        fold_ways=int(fold_ways),
        needs_mask=bool(needs_mask),
        has_dummy=bool(has_dummy),
    )

    last_tile = num_tiles - 1
    if has_dummy:
        def in_map(s, t):
            return (jnp.minimum(s * tiles_per_shard + t, last_tile), 0)
    else:
        def in_map(s, t):
            return (s * tiles_per_shard + t, 0)

    partials = pl.pallas_call(
        kernel,
        out_shape=jax.ShapeDtypeStruct((num_shards, SUBLANES, LANES), jnp.float32),
        grid_spec=pltpu.PrefetchScalarGridSpec(
            num_scalar_prefetch=0,
            grid=(num_shards, tiles_per_shard),
            in_specs=[
                pl.BlockSpec((block_rows, LANES), in_map),
                pl.BlockSpec((block_rows, LANES), in_map),
            ],
            out_specs=pl.BlockSpec((1, SUBLANES, LANES), lambda s, t: (s, 0, 0)),
        ),
        compiler_params=pltpu.CompilerParams(
            dimension_semantics=("parallel", "arbitrary"),
            vmem_limit_bytes=VMEM_LIMIT_BYTES,
        ),
        cost_estimate=pl.CostEstimate(
            flops=5 * n,
            transcendentals=n,
            bytes_accessed=2 * n * itemsize + num_shards * SUBLANES * LANES * 4),
    )(x2, y2)

    # Tiny final cross-lane reduction (num_shards * 8 * 128 elements) + mean.
    return jnp.sum(partials) / jnp.float32(n)


def charbonnier_loss(output, gt, epsilon=0.001, *,
                     min_pallas_elems=MIN_PALLAS_ELEMS,
                     max_tile_bytes=TILE_BYTES_PER_INPUT):
    assert output.shape == gt.shape
    if output.dtype != gt.dtype or output.dtype not in (
            jnp.float32, jnp.bfloat16, jnp.float16):
        output = output.astype(jnp.float32)
        gt = gt.astype(jnp.float32)
    eps = float(epsilon)
    n = output.size
    if n < min_pallas_elems:
        # pallas_call launch overhead dwarfs any kernel gain for tiny tensors.
        d = output.astype(jnp.float32) - gt.astype(jnp.float32)
        return jnp.mean(jnp.sqrt(d * d + jnp.float32(eps * eps)))
    return _charbonnier_pallas(output, gt, eps, max_tile_bytes=max_tile_bytes)


if __name__ == "__main__":
    key = jax.random.PRNGKey(0)
    eps = 0.001

    def ref_loss(o, g):
        d = o.astype(jnp.float32) - g.astype(jnp.float32)
        return jnp.mean(jnp.sqrt(d * d + jnp.float32(eps) ** 2))

    k1, k2, k3, k4 = jax.random.split(key, 4)

    # 1) canonical NCHW shape through the Pallas path (single tile, no mask)
    shape = (2, 4, 16, 16)
    o1 = jax.random.normal(k1, shape, dtype=jnp.float32)
    g1 = jax.random.normal(k2, shape, dtype=jnp.float32)
    l1 = jax.block_until_ready(charbonnier_loss(o1, g1, eps, min_pallas_elems=0))
    r1 = ref_loss(o1, g1)
    assert jnp.allclose(l1, r1, rtol=1e-5, atol=1e-6), (l1, r1)

    # 2) ragged shape with tiny forced tiles: exercises pad + tail mask +
    #    the 2-shard megacore split with an odd tile count (dummy-tile path).
    shape2 = (2, 4, 40, 40)
    o2 = jax.random.normal(k3, shape2, dtype=jnp.float32)
    g2 = jax.random.normal(k4, shape2, dtype=jnp.float32)
    l2 = jax.block_until_ready(
        charbonnier_loss(o2, g2, eps, min_pallas_elems=0,
                         max_tile_bytes=16 * LANES * 4))
    r2 = ref_loss(o2, g2)
    assert jnp.allclose(l2, r2, rtol=1e-5, atol=1e-6), (l2, r2)

    # 3) default entry point (small-input plain-JAX fallback)
    l3 = jax.block_until_ready(charbonnier_loss(o1, g1, eps))
    assert jnp.allclose(l3, r1, rtol=1e-5, atol=1e-6), (l3, r1)

    print("KERNEL_OK")
</pallas_src>

<mosaic_0001>
module attributes {stable_mosaic.version = 11 : i64} {
  func.func @_charbonnier_kernel(%arg0: i32, %arg1: i32, %arg2: memref<16x128xf32, #tpu.memory_space<vmem>>, %arg3: memref<16x128xf32, #tpu.memory_space<vmem>>, %arg4: memref<1x8x128xf32, #tpu.memory_space<vmem>>) attributes {dimension_semantics = [#tpu.dimension_semantics<parallel>, #tpu.dimension_semantics<arbitrary>], iteration_bounds = array<i64: 1, 1>, scalar_prefetch = 0 : i64, scratch_operands = 0 : i64, tpu.core_type = #tpu.core_type<tc>, window_params = [{transform_indices = @transform_0, window_bounds = array<i64: 16, 128>}, {transform_indices = @transform_1, window_bounds = array<i64: 16, 128>}, {transform_indices = @transform_2, window_bounds = array<i64: 1, 8, 128>}]} {
    %c0_i32 = arith.constant 0 : i32
    %0 = arith.cmpi eq, %arg1, %c0_i32 : i32
    %1 = arith.extui %0 : i1 to i32
    %c0_i32_0 = arith.constant 0 : i32
    %2 = arith.cmpi ne, %1, %c0_i32_0 : i32
    scf.if %2 {
      %cst_12 = arith.constant 0.000000e+00 : f32
      %17 = vector.broadcast %cst_12 : f32 to vector<1x8x128xf32>
      %c0_13 = arith.constant 0 : index
      %c0_14 = arith.constant 0 : index
      %c0_15 = arith.constant 0 : index
      %18 = vector.load %arg4[%c0_13, %c0_14, %c0_15] : memref<1x8x128xf32, #tpu.memory_space<vmem>>, vector<1x8x128xf32>
      tpu.vector_store %arg4[%c0_13, %c0_14, %c0_15], %17 {strides = array<i32>} : memref<1x8x128xf32, #tpu.memory_space<vmem>>, vector<1x8x128xf32>,
    } else {
    }
    %c0 = arith.constant 0 : index
    %c0_1 = arith.constant 0 : index
    %3 = vector.load %arg2[%c0, %c0_1] : memref<16x128xf32, #tpu.memory_space<vmem>>, vector<16x128xf32>
    %c0_2 = arith.constant 0 : index
    %c0_3 = arith.constant 0 : index
    %4 = vector.load %arg3[%c0_2, %c0_3] : memref<16x128xf32, #tpu.memory_space<vmem>>, vector<16x128xf32>
    %5 = arith.subf %3, %4 : vector<16x128xf32>
    %6 = arith.mulf %5, %5 : vector<16x128xf32>
    %cst = arith.constant 9.99999997E-7 : f32
    %7 = vector.broadcast %cst : f32 to vector<16x128xf32>
    %8 = arith.addf %6, %7 : vector<16x128xf32>
    %9 = math.sqrt %8 : vector<16x128xf32>
    %c0_4 = arith.constant 0 : index
    %c0_5 = arith.constant 0 : index
    %c0_6 = arith.constant 0 : index
    %10 = vector.load %arg4[%c0_4, %c0_5, %c0_6] : memref<1x8x128xf32, #tpu.memory_space<vmem>>, vector<1x8x128xf32>
    %11 = vector.shape_cast %9 : vector<16x128xf32> to vector<2x1x8x128xf32>
    %cst_7 = arith.constant dense<0.000000e+00> : vector<2x8x128xf32>
    %12 = vector.multi_reduction <add>, %11, %cst_7 [1] : vector<2x1x8x128xf32> to vector<2x8x128xf32>
    %cst_8 = arith.constant dense<0.000000e+00> : vector<8x128xf32>
    %13 = vector.multi_reduction <add>, %12, %cst_8 [0] : vector<2x8x128xf32> to vector<8x128xf32>
    %14 = vector.shape_cast %13 : vector<8x128xf32> to vector<1x8x128xf32>
    %15 = arith.addf %10, %14 : vector<1x8x128xf32>
    %c0_9 = arith.constant 0 : index
    %c0_10 = arith.constant 0 : index
    %c0_11 = arith.constant 0 : index
    %16 = vector.load %arg4[%c0_9, %c0_10, %c0_11] : memref<1x8x128xf32, #tpu.memory_space<vmem>>, vector<1x8x128xf32>
    tpu.vector_store %arg4[%c0_9, %c0_10, %c0_11], %15 {strides = array<i32>} : memref<1x8x128xf32, #tpu.memory_space<vmem>>, vector<1x8x128xf32>,
    return
  }
  func.func @transform_0(%arg0: i32, %arg1: i32) -> (i32, i32) {
    %c1_i32 = arith.constant 1 : i32
    %0 = arith.muli %arg0, %c1_i32 : i32
    %1 = arith.addi %0, %arg1 : i32
    %c0_i32 = arith.constant 0 : i32
    %c0_i32_0 = arith.constant 0 : i32
    return %1, %c0_i32 : i32, i32
  }
  func.func @transform_1(%arg0: i32, %arg1: i32) -> (i32, i32) {
    %c1_i32 = arith.constant 1 : i32
    %0 = arith.muli %arg0, %c1_i32 : i32
    %1 = arith.addi %0, %arg1 : i32
    %c0_i32 = arith.constant 0 : i32
    %c0_i32_0 = arith.constant 0 : i32
    return %1, %c0_i32 : i32, i32
  }
  func.func @transform_2(%arg0: i32, %arg1: i32) -> (i32, i32, i32) {
    %c0_i32 = arith.constant 0 : i32
    %c0_i32_0 = arith.constant 0 : i32
    %c0_i32_1 = arith.constant 0 : i32
    return %arg0, %c0_i32, %c0_i32_0 : i32, i32, i32
  }
}

</mosaic_0001>

<llo_original>
// kernel: tpu_custom_call.1
$region0: #{tpu_custom_call.1}
  #allocation0 [shape = 'u32[]', space=smem, size = 0x4, offset = 0x4, fixed_abs, tag = 'smem constant byte address 0x4 - core index']
  #allocation1 [shape = 'u32[144,128]{1,0:T(1,128)}', space=vmem, size = 0x12000, scoped, tag = 'internal scratch']
  %s0 = inlined_call_operand.hbm [shape: f32[16,128], index: 0, kind: input, shape index: {}]
  %s1 = inlined_call_operand.hbm [shape: f32[16,128], index: 1, kind: input, shape index: {}]
  %s2 = inlined_call_operand.hbm [shape: f32[1,8,128], index: 2, kind: output, shape index: {}]
  %s3 = sld [smem:[#allocation0]]
  $region30: #{tpu_custom_call.1} parent=0
    _
  %s5 = ssub.s32 1, %s3
  %s6 = scalar_select 0, %s5, %s3
  $region1: #{tpu_custom_call.1} parent=0
    #allocation2 [shape = 'u8[8192]{0}', space=vmem, size = 0x2000, scoped, tag = 'input window, operand 0, single buffered']
    #allocation3 [shape = 's32[1]{0}', space=sflag, size = 0x4, scoped, tag = 'scoped memory for tpu_custom_call.1']
    #allocation4 [shape = 's32[1]{0}', space=sflag, size = 0x4, scoped, tag = 'scoped memory for tpu_custom_call.1']
    #allocation5 [shape = 'u8[8192]{0}', space=vmem, size = 0x2000, scoped, tag = 'input window, operand 1, single buffered']
    #allocation6 [shape = 's32[1]{0}', space=sflag, size = 0x4, scoped, tag = 'scoped memory for tpu_custom_call.1']
    #allocation7 [shape = 'u8[4096]{0}', space=vmem, size = 0x1000, scoped, tag = 'output window, operand 0, single buffered']
    %7 = vsyncpa [#allocation3], 0
    %8 = vsyncpa [#allocation6], 0
    %9 = vsyncpa [#allocation4], 0
    // Predicated region
    $region2: #{tpu_custom_call.1} parent=1 // pred_check
      _
    $region3: #{tpu_custom_call.1} parent=1 // pred_check_branch
      %11 = sbr.rel (0) target = $region5
    $region4: #{tpu_custom_call.1} parent=1 // pred_region
      %s12 = sadd.s32 0, 0
      %s13 = smul.u32 2, %s12
      %s15 = ssub.s32 256, 256
      %16 = vsyncadd [#allocation3], %s15
      %s17 = smul.addr %s13, 128
      %s18 = scalar_lea.hbm %s0, %s17
      %s19 = sshll.u32 [#allocation2], 4
      %s20 = int_to_ptr.vmem [resolvable:$true] %s19
      %25 = dma.hbm_to_vmem [thread:$0]  %s18, 256, %s20, [#allocation3], 128, 128, 8
    $region5: #{tpu_custom_call.1} parent=1 // pred_fallthru
      _
    // Predicated region
    $region6: #{tpu_custom_call.1} parent=1 // pred_check
      _
    $region7: #{tpu_custom_call.1} parent=1 // pred_check_branch
      %27 = sbr.rel (0) target = $region9
    $region8: #{tpu_custom_call.1} parent=1 // pred_region
      %s28 = sadd.s32 0, 0
      %s29 = smul.u32 2, %s28
      %s31 = ssub.s32 256, 256
      %32 = vsyncadd [#allocation6], %s31
      %s33 = smul.addr %s29, 128
      %s34 = scalar_lea.hbm %s1, %s33
      %s35 = sshll.u32 [#allocation5], 4
      %s36 = int_to_ptr.vmem [resolvable:$true] %s35
      %41 = dma.hbm_to_vmem [thread:$0]  %s34, 256, %s36, [#allocation6], 128, 128, 8
    $region9: #{tpu_custom_call.1} parent=1 // pred_fallthru
      _
    // Predicated region
    $region10: #{tpu_custom_call.1} parent=1 // pred_check
      _
    $region11: #{tpu_custom_call.1} parent=1 // pred_check_branch
      %43 = sbr.rel (0) target = $region13
    $region12: #{tpu_custom_call.1} parent=1 // pred_region
      %44 = dma.done [#allocation3], 256
    $region13: #{tpu_custom_call.1} parent=1 // pred_fallthru
      _
    // Predicated region
    $region14: #{tpu_custom_call.1} parent=1 // pred_check
      _
    $region15: #{tpu_custom_call.1} parent=1 // pred_check_branch
      %46 = sbr.rel (0) target = $region17
    $region16: #{tpu_custom_call.1} parent=1 // pred_region
      %47 = dma.done [#allocation6], 256
    $region17: #{tpu_custom_call.1} parent=1 // pred_fallthru
      _
    %s48 = sadd.s32 0, 0
    %s49 = smul.u32 2, %s48
    %s50 = sadd.s32 0, 0
    %s51 = smul.u32 2, %s50
    %p52 = scmp.eq.s32.totalorder 0, 0
    // Predicated region
    $region18: #{tpu_custom_call.1} parent=1 // pred_check
      %p53 = pneg %p52
    $region19: #{tpu_custom_call.1} parent=1 // pred_check_branch
      %55 = sbr.rel (%p53) target = $region21
    $region20: #{tpu_custom_call.1} parent=1 // pred_region
      %56 = vst [vmem:[#allocation7] sm:$0xff] 0.0
    $region21: #{tpu_custom_call.1} parent=1 // pred_fallthru
      _
    %v57 = vld [vmem:[#allocation2] sm:$0xff]
    %v58 = vld [vmem:[#allocation2 + $0x8] sm:$0xff]
    %v59 = vld [vmem:[#allocation5] sm:$0xff]
    %v60 = vld [vmem:[#allocation5 + $0x8] sm:$0xff]
    %v61 = vsub.f32 %v57, %v59
    %v62 = vsub.f32 %v58, %v60
    %v63 = vmul.f32 %v61, %v61
    %v64 = vmul.f32 %v62, %v62
    %v65 = vadd.f32 %v63, 1e-06
    %v66 = vadd.f32 %v64, 1e-06
    %v67 = vrsqrt.pop %v65
    %v68 = vmul.f32 %v65, %v67
    %vm69 = vcmp.eq.f32.partialorder %v65, inf
    %v70 = vsel %vm69, %v65, %v68
    %vm71 = vcmp.eq.f32.partialorder %v65, 0.0
    %v72 = vand.u32 %v65, 2147483648
    %v73 = vsel %vm71, %v72, %v70
    %v74 = vrsqrt.pop %v66
    %v75 = vmul.f32 %v66, %v74
    %vm76 = vcmp.eq.f32.partialorder %v66, inf
    %v77 = vsel %vm76, %v66, %v75
    %vm78 = vcmp.eq.f32.partialorder %v66, 0.0
    %v79 = vand.u32 %v66, 2147483648
    %v80 = vsel %vm78, %v79, %v77
    %v81 = vld [vmem:[#allocation7] sm:$0xff]
    %v82 = vadd.f32 %v73, 0.0
    %v83 = vadd.f32 %v80, 0.0
    %v84 = vadd.f32 %v82, %v83
    %v85 = vadd.f32 %v81, %v84
    %86 = vst [vmem:[#allocation7] sm:$0xff] %v85
    // Predicated region
    $region22: #{tpu_custom_call.1} parent=1 // pred_check
      _
    $region23: #{tpu_custom_call.1} parent=1 // pred_check_branch
      %88 = sbr.rel (0) target = $region25
    $region24: #{tpu_custom_call.1} parent=1 // pred_region
      %s90 = ssub.s32 128, 128
      %91 = vsyncadd [#allocation4], %s90
      %s93 = sshll.u32 [#allocation7], 4
      %s94 = int_to_ptr.vmem [resolvable:$true] %s93
      %96 = dma.vmem_to_hbm [thread:$0]  %s94, 128, %s2, [#allocation4]
    $region25: #{tpu_custom_call.1} parent=1 // pred_fallthru
      _
    // Predicated region
    $region26: #{tpu_custom_call.1} parent=1 // pred_check
      _
    $region27: #{tpu_custom_call.1} parent=1 // pred_check_branch
      %98 = sbr.rel (0) target = $region29
    $region28: #{tpu_custom_call.1} parent=1 // pred_region
      %99 = dma.done [#allocation4], 128
    $region29: #{tpu_custom_call.1} parent=1 // pred_fallthru
      _
    %100 = vsyncpa [#allocation3], 1
    %101 = vsyncpa [#allocation6], 1
    %102 = vsyncpa [#allocation4], 1

</llo_original>
